<compile_context>
chip_gen: v7x
topology: tpu7x:2x2x1
jax: 0.10.0
libtpu: 0.0.40
codegen_flags: <defaults>
</compile_context>

<pallas_src>
import functools

import jax
import jax.numpy as jnp
from jax import lax
from jax.experimental import pallas as pl
from jax.experimental.pallas import tpu as pltpu

BN_EPS = 1e-5


def _stats_kernel(x_ref, sum_ref, gram_ref, *, tile_m, hw):
    # x_ref: (Cin, TM).  sum_ref: (Cin, 1) f32, gram_ref: (Cin, Cin) f32 — per-sample
    # accumulators, resident across the tile axis (grid axis 1).
    i = pl.program_id(1)

    @pl.when(i == 0)
    def _init():
        sum_ref[...] = jnp.zeros_like(sum_ref)
        gram_ref[...] = jnp.zeros_like(gram_ref)

    x = x_ref[...]
    if hw % tile_m != 0:
        # cdiv grid: zero the tail columns past HW so they don't pollute the stats.
        col = i * tile_m + lax.broadcasted_iota(jnp.int32, x.shape, 1)
        x = jnp.where(col < hw, x, jnp.zeros_like(x))

    sum_ref[...] += jnp.sum(x.astype(jnp.float32), axis=1, keepdims=True)
    # Gram matrix: (Cin, TM) x (Cin, TM) contracted over TM -> (Cin, Cin) on the MXU,
    # no materialized transpose, f32 accumulate.
    gram_ref[...] += lax.dot_general(
        x, x, (((1,), (1,)), ((), ())), preferred_element_type=jnp.float32)


def _norm_kernel(x_ref, w_ref, shift_ref, o_ref):
    # x_ref: (Cin, TM)  w_ref: (TCout, Cin) BN-scale-folded  shift_ref: (TCout, 1) f32
    # o_ref: (TCout, TM)  — fused  max(W_scaled @ x + shift, 0).
    y = jnp.dot(w_ref[...], x_ref[...], preferred_element_type=jnp.float32)
    o_ref[...] = jnp.maximum(y + shift_ref[...], 0.0).astype(o_ref.dtype)


def _plan_tiles(hw, cin, tcout, x_bytes, w_bytes, out_bytes,
                budget_bytes=20 * 1024 * 1024):
    """Pick TM (multiple of 128) and per-pass vmem limits from an honest footprint.

    Accounts for: x tile (double-buffered), masked/f32 x copy, Gram + sum accumulators
    (pass 1); x tile, weight block, (TCout, TM) f32 matmul result and output tile
    (double-buffered) (pass 2).  budget_bytes ~20 MiB is safe on v5e/v6e/v7x; on v6e
    (128 MiB VMEM) it can be raised toward 24 MiB, on v7x keep it <= ~28 MiB.
    """
    mib = 1024 * 1024
    hw_pad = -(-hw // 128) * 128

    p1_per_col = cin * x_bytes * 2 + cin * 4                      # x tile x2 + f32 copy
    p1_fixed = (cin * cin + cin) * 4 * 2                          # Gram + sum (+result)
    p2_per_col = cin * x_bytes * 2 + tcout * out_bytes * 2 + tcout * 4 * 2
    p2_fixed = tcout * cin * w_bytes * 2 + tcout * 4 * 2          # weight + shift blocks

    per_col = max(p1_per_col, p2_per_col, 1)
    fixed = max(p1_fixed, p2_fixed)
    cols = max(1, (budget_bytes - fixed) // per_col)
    tm = min(max(128, (cols // 128) * 128), hw_pad)

    vmem1 = int(min(128 * mib, max(32 * mib, p1_fixed + tm * p1_per_col + 4 * mib)))
    vmem2 = int(min(128 * mib, max(32 * mib, p2_fixed + tm * p2_per_col + 4 * mib)))
    return tm, vmem1, vmem2


def conv1x1_bn_relu(x_nchw, weight, gamma, beta, eps=BN_EPS):
    """x_nchw: (N, Cin, H, W); weight: (Cout, Cin) or (Cout, Cin, 1, 1); gamma/beta: (Cout,)."""
    N, Cin, H, W = x_nchw.shape
    w2d = weight.reshape(weight.shape[0], Cin)
    Cout = w2d.shape[0]
    HW = H * W
    M = N * HW

    # Free contiguous reshape: x3[n] is (Cin, HW); spatial maps to the lane axis.
    x3 = x_nchw.reshape(N, Cin, HW)

    x_bytes = jnp.dtype(x_nchw.dtype).itemsize
    out_bytes = x_bytes
    # Cout tiling toward the MXU width when Cout is large (bounds weight block + f32 y).
    TCout = 256 if (Cout > 256 and Cout % 256 == 0) else Cout
    TM, vmem1, vmem2 = _plan_tiles(HW, Cin, TCout, x_bytes, x_bytes, out_bytes)
    num_i = pl.cdiv(HW, TM)

    # ---- Pass 1: per-sample sum(x) and Gram(x) over the spatial axis ----
    x_spec1 = pl.BlockSpec((None, Cin, TM), lambda n, i: (n, 0, i))
    sum_spec = pl.BlockSpec((None, Cin, 1), lambda n, i: (n, 0, 0))
    gram_spec = pl.BlockSpec((None, Cin, Cin), lambda n, i: (n, 0, 0))

    cost1 = pl.CostEstimate(
        flops=2 * M * Cin * Cin,
        transcendentals=0,
        bytes_accessed=M * Cin * x_bytes + N * Cin * (Cin + 1) * 4,
    )
    sum_x, gram = pl.pallas_call(
        functools.partial(_stats_kernel, tile_m=TM, hw=HW),
        out_shape=(jax.ShapeDtypeStruct((N, Cin, 1), jnp.float32),
                   jax.ShapeDtypeStruct((N, Cin, Cin), jnp.float32)),
        grid=(N, num_i),
        in_specs=[x_spec1],
        out_specs=(sum_spec, gram_spec),
        compiler_params=pltpu.CompilerParams(
            # Per-sample partial accumulators -> N axis is parallel (2 TCs on v7x);
            # the spatial-tile axis carries the accumulation -> arbitrary.
            dimension_semantics=("parallel", "arbitrary"),
            vmem_limit_bytes=vmem1),
        cost_estimate=cost1,
    )(x3)

    # ---- Glue: derive BN batch stats from input stats, fold scale into the weight ----
    sum_x_tot = jnp.sum(sum_x, axis=0)                      # (Cin, 1)
    gram_tot = jnp.sum(gram, axis=0)                        # (Cin, Cin)
    w_f32 = w2d.astype(jnp.float32)                         # (Cout, Cin)
    sum_y = w_f32 @ sum_x_tot                               # (Cout, 1)
    sumsq_y = jnp.sum((w_f32 @ gram_tot) * w_f32, axis=1, keepdims=True)  # diag(W G W^T)
    mean = sum_y / M
    var = jnp.maximum(sumsq_y / M - mean * mean, 0.0)       # biased var (PyTorch BN norm)
    scale = gamma.reshape(Cout, 1).astype(jnp.float32) * lax.rsqrt(var + eps)
    shift = beta.reshape(Cout, 1).astype(jnp.float32) - mean * scale
    # Fold BN scale into the weight in f32; cast once to the matmul dtype.
    w_scaled = (w_f32 * scale).astype(x_nchw.dtype)
    # TODO(synk): BatchNorm2d running_mean / running_var buffer updates (momentum,
    # unbiased running_var) are not produced.

    # ---- Pass 2: fused  max(W_scaled @ x + shift, 0), lane-dense output tiles ----
    num_c = Cout // TCout
    x_spec2 = pl.BlockSpec((None, Cin, TM), lambda n, c, i: (n, 0, i))
    w_spec2 = pl.BlockSpec((TCout, Cin), lambda n, c, i: (c, 0))
    shift_spec = pl.BlockSpec((TCout, 1), lambda n, c, i: (c, 0))
    o_spec = pl.BlockSpec((None, TCout, TM), lambda n, c, i: (n, c, i))

    cost2 = pl.CostEstimate(
        flops=2 * M * Cin * Cout,
        transcendentals=0,
        bytes_accessed=(M * Cin * x_bytes * num_c + M * Cout * out_bytes
                        + Cout * Cin * x_bytes + Cout * 4),
    )
    out3 = pl.pallas_call(
        _norm_kernel,
        out_shape=jax.ShapeDtypeStruct((N, Cout, HW), x_nchw.dtype),
        grid=(N, num_c, num_i),
        in_specs=[x_spec2, w_spec2, shift_spec],
        out_specs=o_spec,
        compiler_params=pltpu.CompilerParams(
            dimension_semantics=("parallel", "parallel", "parallel"),
            vmem_limit_bytes=vmem2),
        cost_estimate=cost2,
    )(x3, w_scaled, shift)

    return out3.reshape(N, Cout, H, W)


if __name__ == "__main__":
    key = jax.random.PRNGKey(0)
    k_x, k_w = jax.random.split(key)

    N, Cin, Cout, H, W = 2, 4, 8, 16, 16

    x = jax.random.normal(k_x, (N, Cin, H, W), dtype=jnp.float32)

    # Synthetic, deterministic parameters (no checkpoint):
    # Conv2d 1x1 weight (Cout, Cin, 1, 1), kaiming-ish scale; BN affine at PyTorch init.
    weight = jax.random.normal(k_w, (Cout, Cin, 1, 1), dtype=jnp.float32) * (2.0 / Cin) ** 0.5
    gamma = jnp.ones((Cout,), dtype=jnp.float32)
    beta = jnp.zeros((Cout,), dtype=jnp.float32)

    out = conv1x1_bn_relu(x, weight, gamma, beta)
    out = jax.block_until_ready(out)
    assert out.shape == (N, Cout, H, W)

    # Pure-JAX reference: conv1x1 + training-mode BatchNorm2d + ReLU.
    w2d = weight.reshape(Cout, Cin)
    y_ref = jnp.einsum("nchw,oc->nohw", x, w2d)
    mean = jnp.mean(y_ref, axis=(0, 2, 3), keepdims=True)
    var = jnp.mean((y_ref - mean) ** 2, axis=(0, 2, 3), keepdims=True)
    ref = jnp.maximum(
        (y_ref - mean) * lax.rsqrt(var + BN_EPS) * gamma.reshape(1, Cout, 1, 1)
        + beta.reshape(1, Cout, 1, 1),
        0.0,
    )
    err = float(jnp.max(jnp.abs(out - ref)))
    assert err < 1e-3, f"max abs err {err}"

    print("KERNEL_OK")
</pallas_src>

<mosaic_0001>
module attributes {stable_mosaic.version = 11 : i64} {
  func.func @_stats_kernel(%arg0: i32, %arg1: i32, %arg2: memref<1x4x256xf32, #tpu.memory_space<vmem>>, %arg3: memref<1x4x1xf32, #tpu.memory_space<vmem>>, %arg4: memref<1x4x4xf32, #tpu.memory_space<vmem>>) attributes {dimension_semantics = [#tpu.dimension_semantics<parallel>, #tpu.dimension_semantics<arbitrary>], iteration_bounds = array<i64: 2, 1>, scalar_prefetch = 0 : i64, scratch_operands = 0 : i64, tpu.core_type = #tpu.core_type<tc>, window_params = [{transform_indices = @transform_0, window_bounds = array<i64: 1, 4, 256>}, {transform_indices = @transform_1, window_bounds = array<i64: 1, 4, 1>}, {transform_indices = @transform_2, window_bounds = array<i64: 1, 4, 4>}]} {
    %c0_i32 = arith.constant 0 : i32
    %0 = arith.cmpi eq, %arg1, %c0_i32 : i32
    %1 = arith.extui %0 : i1 to i32
    %c0_i32_0 = arith.constant 0 : i32
    %2 = arith.cmpi ne, %1, %c0_i32_0 : i32
    scf.if %2 {
      %cst_16 = arith.constant 0.000000e+00 : f32
      %20 = vector.broadcast %cst_16 : f32 to vector<4x1xf32>
      %c0_17 = arith.constant 0 : index
      %c0_18 = arith.constant 0 : index
      %c0_19 = arith.constant 0 : index
      %21 = vector.load %arg3[%c0_17, %c0_18, %c0_19] : memref<1x4x1xf32, #tpu.memory_space<vmem>>, vector<1x4x1xf32>
      %22 = vector.shape_cast %21 : vector<1x4x1xf32> to vector<4x1xf32>
      %23 = vector.shape_cast %20 : vector<4x1xf32> to vector<1x4x1xf32>
      tpu.vector_store %arg3[%c0_17, %c0_18, %c0_19], %23 {strides = array<i32>} : memref<1x4x1xf32, #tpu.memory_space<vmem>>, vector<1x4x1xf32>,
      %cst_20 = arith.constant 0.000000e+00 : f32
      %24 = vector.broadcast %cst_20 : f32 to vector<4x4xf32>
      %c0_21 = arith.constant 0 : index
      %c0_22 = arith.constant 0 : index
      %c0_23 = arith.constant 0 : index
      %25 = vector.load %arg4[%c0_21, %c0_22, %c0_23] : memref<1x4x4xf32, #tpu.memory_space<vmem>>, vector<1x4x4xf32>
      %26 = vector.shape_cast %25 : vector<1x4x4xf32> to vector<4x4xf32>
      %27 = vector.shape_cast %24 : vector<4x4xf32> to vector<1x4x4xf32>
      tpu.vector_store %arg4[%c0_21, %c0_22, %c0_23], %27 {strides = array<i32>} : memref<1x4x4xf32, #tpu.memory_space<vmem>>, vector<1x4x4xf32>,
    } else {
    }
    %c0 = arith.constant 0 : index
    %c0_1 = arith.constant 0 : index
    %c0_2 = arith.constant 0 : index
    %3 = vector.load %arg2[%c0, %c0_1, %c0_2] : memref<1x4x256xf32, #tpu.memory_space<vmem>>, vector<1x4x256xf32>
    %4 = vector.shape_cast %3 : vector<1x4x256xf32> to vector<4x256xf32>
    %c0_3 = arith.constant 0 : index
    %c0_4 = arith.constant 0 : index
    %c0_5 = arith.constant 0 : index
    %5 = vector.load %arg3[%c0_3, %c0_4, %c0_5] : memref<1x4x1xf32, #tpu.memory_space<vmem>>, vector<1x4x1xf32>
    %6 = vector.shape_cast %5 : vector<1x4x1xf32> to vector<4x1xf32>
    %cst = arith.constant dense<0.000000e+00> : vector<4xf32>
    %7 = vector.multi_reduction <add>, %4, %cst [1] : vector<4x256xf32> to vector<4xf32>
    %8 = vector.shape_cast %7 : vector<4xf32> to vector<4x1xf32>
    %9 = arith.addf %6, %8 : vector<4x1xf32>
    %c0_6 = arith.constant 0 : index
    %c0_7 = arith.constant 0 : index
    %c0_8 = arith.constant 0 : index
    %10 = vector.load %arg3[%c0_6, %c0_7, %c0_8] : memref<1x4x1xf32, #tpu.memory_space<vmem>>, vector<1x4x1xf32>
    %11 = vector.shape_cast %10 : vector<1x4x1xf32> to vector<4x1xf32>
    %12 = vector.shape_cast %9 : vector<4x1xf32> to vector<1x4x1xf32>
    tpu.vector_store %arg3[%c0_6, %c0_7, %c0_8], %12 {strides = array<i32>} : memref<1x4x1xf32, #tpu.memory_space<vmem>>, vector<1x4x1xf32>,
    %c0_9 = arith.constant 0 : index
    %c0_10 = arith.constant 0 : index
    %c0_11 = arith.constant 0 : index
    %13 = vector.load %arg4[%c0_9, %c0_10, %c0_11] : memref<1x4x4xf32, #tpu.memory_space<vmem>>, vector<1x4x4xf32>
    %14 = vector.shape_cast %13 : vector<1x4x4xf32> to vector<4x4xf32>
    %cst_12 = arith.constant dense<0.000000e+00> : vector<4x4xf32>
    %15 = tpu.matmul %4, %4, %cst_12 {dimension_numbers = #tpu.dot_dimension_numbers<[1], [1], [0], [0], [0, 0, 1, 0], [], []>} : vector<4x256xf32>, vector<4x256xf32>, vector<4x4xf32> -> vector<4x4xf32>
    %16 = arith.addf %14, %15 : vector<4x4xf32>
    %c0_13 = arith.constant 0 : index
    %c0_14 = arith.constant 0 : index
    %c0_15 = arith.constant 0 : index
    %17 = vector.load %arg4[%c0_13, %c0_14, %c0_15] : memref<1x4x4xf32, #tpu.memory_space<vmem>>, vector<1x4x4xf32>
    %18 = vector.shape_cast %17 : vector<1x4x4xf32> to vector<4x4xf32>
    %19 = vector.shape_cast %16 : vector<4x4xf32> to vector<1x4x4xf32>
    tpu.vector_store %arg4[%c0_13, %c0_14, %c0_15], %19 {strides = array<i32>} : memref<1x4x4xf32, #tpu.memory_space<vmem>>, vector<1x4x4xf32>,
    return
  }
  func.func @transform_0(%arg0: i32, %arg1: i32) -> (i32, i32, i32) {
    %c0_i32 = arith.constant 0 : i32
    %c0_i32_0 = arith.constant 0 : i32
    return %arg0, %c0_i32, %arg1 : i32, i32, i32
  }
  func.func @transform_1(%arg0: i32, %arg1: i32) -> (i32, i32, i32) {
    %c0_i32 = arith.constant 0 : i32
    %c0_i32_0 = arith.constant 0 : i32
    %c0_i32_1 = arith.constant 0 : i32
    return %arg0, %c0_i32, %c0_i32_0 : i32, i32, i32
  }
  func.func @transform_2(%arg0: i32, %arg1: i32) -> (i32, i32, i32) {
    %c0_i32 = arith.constant 0 : i32
    %c0_i32_0 = arith.constant 0 : i32
    %c0_i32_1 = arith.constant 0 : i32
    return %arg0, %c0_i32, %c0_i32_0 : i32, i32, i32
  }
}

</mosaic_0001>

<llo_original>
// kernel: tpu_custom_call.1
$region0: #{tpu_custom_call.1}
  #allocation0 [shape = 'u32[]', space=smem, size = 0x4, offset = 0x4, fixed_abs, tag = 'smem constant byte address 0x4 - core index']
  #allocation1 [shape = 'u32[144,128]{1,0:T(1,128)}', space=vmem, size = 0x12000, scoped, tag = 'internal scratch']
  %s0 = inlined_call_operand.hbm [shape: f32[2,4,256], index: 0, kind: input, shape index: {}]
  %s1 = inlined_call_operand.vmem [shape: f32[2,4,1], index: 1, kind: output, shape index: {0}]
  %s2 = inlined_call_operand.hbm [shape: f32[2,4,4], index: 2, kind: output, shape index: {1}]
  %3 = xla_tuple %s1, %s2
  %s4 = sld [smem:[#allocation0]]
  $region53: #{tpu_custom_call.1} parent=0
    _
  %s6 = ssub.s32 1, %s4
  %s7 = scalar_select 0, %s6, %s4
  $region1: #{tpu_custom_call.1} parent=0
    #allocation2 [shape = 'u8[8192]{0}', space=vmem, size = 0x2000, scoped, tag = 'input window, operand 0']
    #allocation3 [shape = 's32[2]{0}', space=sflag, size = 0x8, scoped, tag = 'scoped memory for tpu_custom_call.1']
    #allocation4 [shape = 's32[2]{0}', space=sflag, size = 0x8, scoped, tag = 'scoped memory for tpu_custom_call.1']
    #allocation5 [shape = 'u8[4096]{0}', space=vmem, size = 0x1000, scoped, tag = 'output window, operand 1']
    %8 = vsyncpa [#allocation3], 0
    %s9 = scalar_lea.sflag [#allocation3], 1
    %10 = vsyncpa %s9, 0
    %11 = vsyncpa [#allocation4], 0
    %s12 = scalar_lea.sflag [#allocation4], 1
    %13 = vsyncpa %s12, 0
    loop: start=0, step=1, limit=4
    $region2: #{tpu_custom_call.1} parent=1 // loop_pre_header
      _
    $region3: #{tpu_custom_call.1} parent=1 // loop_header
      %s15 = sphi 0, %s19
      %p16 = scmp.ge.s32.totalorder %s15, 4
      %s22 = sphi 0, %s34
      %s23 = sphi 0, %s30
      %s24 = sphi 0, %s22
      %s25 = sphi 0, %s23
      %s26 = sphi 0, %s24
      %s27 = sphi 0, %s25
      %s39 = sphi 0, %s41
      %s42 = sphi 0, %s39
      %s43 = sphi 0, %s42
      %s59 = sphi 0, %s43
      %s65 = sphi 0, %s67
      %s68 = sphi 0, %s65
      %s69 = sphi 0, %s68
      %s85 = sphi 0, %s69
      %s91 = sphi 0, %s93
      %s94 = sphi 0, %s91
      %s95 = sphi 0, %s94
      %s111 = sphi 0, %s95
    $region4: #{tpu_custom_call.1} parent=1 // loop_header_branch
      %18 = sbr.rel (%p16) target = $region8
    $region5: #{tpu_custom_call.1} parent=1 // loop_body
      %s20 = ssub.s32 %s15, 1
      %s21 = ssub.s32 %s15, 2
      %s28 = sadd.s32 1, %s23
      %p29 = scmp.ge.s32.totalorder %s28, 1
      %s30 = scalar_select %p29, 0, %s28
      %s31 = sadd.s32 1, %s22
      %s32 = scalar_select %p29, %s31, %s22
      %p33 = scmp.ge.s32.totalorder %s32, 2
      %s34 = scalar_select %p33, 0, %s32
      %s35 = ssub.s32 %s22, %s34
      %s36 = ssub.s32 %s23, %s30
      %s37 = sor.u32 %s35, %s36
      %p38 = scmp.eq.s32.totalorder %s37, 0
      %s40 = sadd.s32 %s39, 1
      %s41 = scalar_select %p38, %s39, %s40
      %p44 = pneg %p38
      %p45 = scmp.eq.s32.totalorder %s15, 1
      %p46 = por %p44, %p45
      %p47 = scmp.ne.s32.totalorder %s39, %s42
      %p48 = scmp.eq.s32.totalorder %s15, 0
      %p49 = por %p47, %p48
      %p50 = scmp.ne.s32.totalorder %s39, %s42
      %p51 = scmp.eq.s32.totalorder %s20, 1
      %p52 = por %p50, %p51
      %p53 = scmp.ne.s32.totalorder %s42, %s43
      %p54 = scmp.eq.s32.totalorder %s20, 0
      %p55 = por %p53, %p54
      %p56 = scmp.ne.s32.totalorder %s42, %s43
      %p57 = scmp.eq.s32.totalorder %s21, 1
      %p58 = por %p56, %p57
      %p60 = scmp.ne.s32.totalorder %s43, %s59
      %p61 = scmp.eq.s32.totalorder %s21, 0
      %p62 = por %p60, %p61
      %s63 = ssub.s32 %s22, %s34
      %p64 = scmp.eq.s32.totalorder %s63, 0
      %s66 = sadd.s32 %s65, 1
      %s67 = scalar_select %p64, %s65, %s66
      %p70 = pneg %p64
      %p71 = scmp.eq.s32.totalorder %s15, 1
      %p72 = por %p70, %p71
      %p73 = scmp.ne.s32.totalorder %s65, %s68
      %p74 = scmp.eq.s32.totalorder %s15, 0
      %p75 = por %p73, %p74
      %p76 = scmp.ne.s32.totalorder %s65, %s68
      %p77 = scmp.eq.s32.totalorder %s20, 1
      %p78 = por %p76, %p77
      %p79 = scmp.ne.s32.totalorder %s68, %s69
      %p80 = scmp.eq.s32.totalorder %s20, 0
      %p81 = por %p79, %p80
      %p82 = scmp.ne.s32.totalorder %s68, %s69
      %p83 = scmp.eq.s32.totalorder %s21, 1
      %p84 = por %p82, %p83
      %p86 = scmp.ne.s32.totalorder %s69, %s85
      %p87 = scmp.eq.s32.totalorder %s21, 0
      %p88 = por %p86, %p87
      %s89 = ssub.s32 %s22, %s34
      %p90 = scmp.eq.s32.totalorder %s89, 0
      %s92 = sadd.s32 %s91, 1
      %s93 = scalar_select %p90, %s91, %s92
      %p96 = pneg %p90
      %p97 = scmp.eq.s32.totalorder %s15, 1
      %p98 = por %p96, %p97
      %p99 = scmp.ne.s32.totalorder %s91, %s94
      %p100 = scmp.eq.s32.totalorder %s15, 0
      %p101 = por %p99, %p100
      %p102 = scmp.ne.s32.totalorder %s91, %s94
      %p103 = scmp.eq.s32.totalorder %s20, 1
      %p104 = por %p102, %p103
      %p105 = scmp.ne.s32.totalorder %s94, %s95
      %p106 = scmp.eq.s32.totalorder %s20, 0
      %p107 = por %p105, %p106
      %p108 = scmp.ne.s32.totalorder %s94, %s95
      %p109 = scmp.eq.s32.totalorder %s21, 1
      %p110 = por %p108, %p109
      %p112 = scmp.ne.s32.totalorder %s95, %s111
      %p113 = scmp.eq.s32.totalorder %s21, 0
      %p114 = por %p112, %p113
      %p115 = scmp.le.s32.totalorder 1, %s15
      %p116 = scmp.lt.s32.totalorder %s15, 3
      %p117 = pnand %p115, %p116
      %p118 = pneg %p117
      // Predicated region
      $region9: #{tpu_custom_call.1} parent=5 // pred_check
        _
      $region10: #{tpu_custom_call.1} parent=5 // pred_check_branch
        %120 = sbr.rel (%p117) target = $region12
      $region11: #{tpu_custom_call.1} parent=5 // pred_region
        %s121 = ssub.s32 %s15, 1
      $region12: #{tpu_custom_call.1} parent=5 // pred_fallthru
        _
      %p122 = scmp.lt.s32.totalorder %s15, 2
      // Predicated region
      $region13: #{tpu_custom_call.1} parent=5 // pred_check
        %p123 = pneg %p122
      $region14: #{tpu_custom_call.1} parent=5 // pred_check_branch
        %125 = sbr.rel (%p123) target = $region16
      $region15: #{tpu_custom_call.1} parent=5 // pred_region
        // Predicated region
        $region17: #{tpu_custom_call.1} parent=15 // pred_check
          %p126 = pneg %p49
        $region18: #{tpu_custom_call.1} parent=15 // pred_check_branch
          %128 = sbr.rel (%p126) target = $region20
        $region19: #{tpu_custom_call.1} parent=15 // pred_region
          %s129 = sand.u32 %s39, 1
          %s130 = scalar_lea.sflag [#allocation3], %s129
          %s131 = sand.u32 %s39, 1
          %s132 = smul.addr %s131, 8
          %s133 = scalar_lea.vmem [#allocation2], %s132
          %s134 = smul.u32 2, %s23
          %s136 = ssub.s32 128, 128
          %137 = vsyncadd %s130, %s136
          %s138 = smul.addr %s22, 2
          %s139 = sadd.s32 %s134, %s138
          %s140 = smul.addr %s139, 64
          %s141 = scalar_lea.hbm %s0, %s140
          %s143 = sshll.u32 %s133, 4
          %s144 = int_to_ptr.vmem [resolvable:$true] %s143
          %146 = dma.hbm_to_vmem [thread:$0]  %s141, 128, %s144, %s130
        $region20: #{tpu_custom_call.1} parent=15 // pred_fallthru
          _
      $region16: #{tpu_custom_call.1} parent=5 // pred_fallthru
        _
      %p147 = scmp.le.s32.totalorder 1, %s15
      %p148 = scmp.lt.s32.totalorder %s15, 3
      %p149 = pnand %p147, %p148
      %p150 = pneg %p149
      // Predicated region
      $region21: #{tpu_custom_call.1} parent=5 // pred_check
        _
      $region22: #{tpu_custom_call.1} parent=5 // pred_check_branch
        %152 = sbr.rel (%p149) target = $region24
      $region23: #{tpu_custom_call.1} parent=5 // pred_region
        %s153 = ssub.s32 %s15, 1
        %s154 = sand.u32 %s42, 1
        %s155 = scalar_lea.sflag [#allocation3], %s154
        %s156 = sand.u32 %s42, 1
        %s157 = smul.addr %s156, 8
        %s158 = scalar_lea.vmem [#allocation2], %s157
        // Predicated region
        $region25: #{tpu_custom_call.1} parent=23 // pred_check
          %p159 = pneg %p55
        $region26: #{tpu_custom_call.1} parent=23 // pred_check_branch
          %161 = sbr.rel (%p159) target = $region28
        $region27: #{tpu_custom_call.1} parent=23 // pred_region
          %162 = dma.done %s155, 128
        $region28: #{tpu_custom_call.1} parent=23 // pred_fallthru
          _
        %s163 = sand.u32 %s42, 1
        %s164 = scalar_lea.sflag [#allocation3], %s163
        %s165 = sand.u32 %s42, 1
        %s166 = smul.addr %s165, 8
        %s167 = scalar_lea.vmem [#allocation2], %s166
        %p168 = pneg %p55
        %p169 = pneg %p52
        %p170 = pneg %p81
        %p171 = pneg %p78
        %p172 = scmp.lt.s32.totalorder %s24, 1
        %s173 = scalar_select %p172, %s24, 1
        %s174 = smul.addr %s173, 4
        %s175 = scalar_lea.vmem %s1, %s174
        %p176 = pneg %p107
        %p177 = pneg %p104
        %s178 = sand.u32 %s94, 1
        %s179 = scalar_lea.sflag [#allocation4], %s178
        %s180 = sand.u32 %s94, 1
        %s181 = smul.addr %s180, 4
        %s182 = scalar_lea.vmem [#allocation5], %s181
        %s183 = smul.u32 2, %s25
        %p184 = scmp.lt.s32.totalorder %s24, 1
        %s185 = scalar_select %p184, %s24, 1
        %s186 = smul.addr %s185, 4
        %s187 = scalar_lea.vmem %s1, %s186
        %p188 = scmp.eq.s32.totalorder %s25, 0
        // Predicated region
        $region29: #{tpu_custom_call.1} parent=23 // pred_check
          %p189 = pneg %p188
        $region30: #{tpu_custom_call.1} parent=23 // pred_check_branch
          %191 = sbr.rel (%p189) target = $region32
        $region31: #{tpu_custom_call.1} parent=23 // pred_region
          %vm192 = vcmask 3072
          %193 = vst.msk [vmem:[%s187] sm:$0xf] %vm192, 0.0
          %vm194 = vcmask 27648
          %195 = vst.msk [vmem:[%s182] sm:$0xf] %vm194, 0.0
        $region32: #{tpu_custom_call.1} parent=23 // pred_fallthru
          _
        %v196 = vld [vmem:[%s158] sm:$0xff]
        %v197 = vld [vmem:[%s187] sm:$0xf]
        %v199 = vcombine.high %v196, %v196
        %vm201 = vcmask 1043456
        %v202 = vsel %vm201, %v196, 0.0
        %v203 = vsel %vm201, %v199, 0.0
        %v204 = vadd.f32 %v202, %v203
        %205 = vadd.xlane.f32.xlu0 %v204
        %v206 = vpop.xlane.xlu0 %205
        %v207 = vadd.f32 %v197, %v206
        %vm208 = vcmask 3072
        %209 = vst.msk [vmem:[%s187] sm:$0xf] %vm208, %v207
        %v210 = vld [vmem:[%s182] sm:$0xf]
        %211 = vmatprep.subr.mxu0 %v199
        %212 = vmatpush1.xpose.msra.mxu0 %v196
        %213 = vmatprep.subr.mxu0 0.0
        %214 = vmatpush1.xpose.msra.mxu0 0.0
        %215 = vmatprep.subr.mxu0 0.0
        %216 = vmatpush1.xpose.msra.mxu0 0.0
        %217 = vmatprep.subr.mxu0 0.0
        %218 = vmatpush1.xpose.msra.mxu0 0.0
        %219 = vmatprep.subr.mxu0 0.0
        %220 = vmatpush1.xpose.msra.mxu0 0.0
        %221 = vmatprep.subr.mxu0 0.0
        %222 = vmatpush1.xpose.msra.mxu0 0.0
        %223 = vmatprep.subr.mxu0 0.0
        %224 = vmatpush1.xpose.msra.mxu0 0.0
        %225 = vmatprep.subr.mxu0 0.0
        %226 = vmatpush1.xpose.msra.mxu0 0.0
        %227 = vmatprep.subr.mxu0 0.0
        %228 = vmatpush1.xpose.msra.mxu0 0.0
        %229 = vmatprep.subr.mxu0 0.0
        %230 = vmatpush1.xpose.msra.mxu0 0.0
        %231 = vmatprep.subr.mxu0 0.0
        %232 = vmatpush1.xpose.msra.mxu0 0.0
        %233 = vmatprep.subr.mxu0 0.0
        %234 = vmatpush1.xpose.msra.mxu0 0.0
        %235 = vmatprep.subr.mxu0 0.0
        %236 = vmatpush1.xpose.msra.mxu0 0.0
        %237 = vmatprep.subr.mxu0 0.0
        %238 = vmatpush1.xpose.msra.mxu0 0.0
        %239 = vmatprep.subr.mxu0 0.0
        %240 = vmatpush1.xpose.msra.mxu0 0.0
        %241 = vmatprep.subr.mxu0 0.0
        %242 = vmatpush1.xpose.msra.mxu0 0.0
        %243 = vmatprep.subr.mxu0 0.0
        %244 = vmatpush1.xpose.msra.mxu0 0.0
        %245 = vmatprep.subr.mxu0 0.0
        %246 = vmatpush1.xpose.msra.mxu0 0.0
        %247 = vmatprep.subr.mxu0 0.0
        %248 = vmatpush1.xpose.msra.mxu0 0.0
        %249 = vmatprep.subr.mxu0 0.0
        %250 = vmatpush1.xpose.msra.mxu0 0.0
        %251 = vmatprep.subr.mxu0 0.0
        %252 = vmatpush1.xpose.msra.mxu0 0.0
        %253 = vmatprep.subr.mxu0 0.0
        %254 = vmatpush1.xpose.msra.mxu0 0.0
        %255 = vmatprep.subr.mxu0 0.0
        %256 = vmatpush1.xpose.msra.mxu0 0.0
        %257 = vmatprep.subr.mxu0 0.0
        %258 = vmatpush1.xpose.msra.mxu0 0.0
        %259 = vmatprep.subr.mxu0 0.0
        %260 = vmatpush1.xpose.msra.mxu0 0.0
        %261 = vmatprep.subr.mxu0 0.0
        %262 = vmatpush1.xpose.msra.mxu0 0.0
        %263 = vmatprep.subr.mxu0 0.0
        %264 = vmatpush1.xpose.msra.mxu0 0.0
        %265 = vmatprep.subr.mxu0 0.0
        %266 = vmatpush1.xpose.msra.mxu0 0.0
        %267 = vmatprep.subr.mxu0 0.0
        %268 = vmatpush1.xpose.msra.mxu0 0.0
        %269 = vmatprep.subr.mxu0 0.0
        %270 = vmatpush1.xpose.msra.mxu0 0.0
        %271 = vmatprep.subr.mxu0 0.0
        %272 = vmatpush1.xpose.msra.mxu0 0.0
        %273 = vmatprep.subr.mxu0 0.0
        %274 = vmatpush1.xpose.msra.mxu0 0.0
        %275 = vmatprep.mubr.f32.mxu0 %v199
        %276 = vmatmul.mubr.f32.gmra.mrb[0].mxu0 %v196
        %v277 = vpop.f32.mrb[0].mxu0
        %v278 = vadd.f32 0.0, %v277
        %v279 = vpop.f32.mrb[0].mxu0
        %280 = vdwg.mxu0
        %v281 = vadd.f32 %v210, %v278
        %vm282 = vcmask 27648
        %283 = vst.msk [vmem:[%s182] sm:$0xf] %vm282, %v281
        %p284 = scmp.lt.s32.totalorder %s24, 1
        %s285 = scalar_select %p284, %s24, 1
        %s286 = smul.addr %s285, 4
        %s287 = scalar_lea.vmem %s1, %s286
        %s288 = sand.u32 %s94, 1
        %s289 = scalar_lea.sflag [#allocation4], %s288
        %s290 = sand.u32 %s94, 1
        %s291 = smul.addr %s290, 4
        %s292 = scalar_lea.vmem [#allocation5], %s291
        // Predicated region
        $region33: #{tpu_custom_call.1} parent=23 // pred_check
          %p293 = pneg %p78
        $region34: #{tpu_custom_call.1} parent=23 // pred_check_branch
          %295 = sbr.rel (%p293) target = $region36
        $region35: #{tpu_custom_call.1} parent=23 // pred_region
          _
        $region36: #{tpu_custom_call.1} parent=23 // pred_fallthru
          _
        // Predicated region
        $region37: #{tpu_custom_call.1} parent=23 // pred_check
          %p296 = pneg %p104
        $region38: #{tpu_custom_call.1} parent=23 // pred_check_branch
          %298 = sbr.rel (%p296) target = $region40
        $region39: #{tpu_custom_call.1} parent=23 // pred_region
          %s300 = ssub.s32 64, 64
          %301 = vsyncadd %s289, %s300
          %s302 = smul.addr %s24, 64
          %s303 = scalar_lea.hbm %s2, %s302
          %s305 = sshll.u32 %s292, 4
          %s306 = int_to_ptr.vmem [resolvable:$true] %s305
          %308 = dma.vmem_to_hbm [thread:$0]  %s306, 64, %s303, %s289
        $region40: #{tpu_custom_call.1} parent=23 // pred_fallthru
          _
      $region24: #{tpu_custom_call.1} parent=5 // pred_fallthru
        _
      %p309 = scmp.le.s32.totalorder 2, %s15
      // Predicated region
      $region41: #{tpu_custom_call.1} parent=5 // pred_check
        %p310 = pneg %p309
      $region42: #{tpu_custom_call.1} parent=5 // pred_check_branch
        %312 = sbr.rel (%p310) target = $region44
      $region43: #{tpu_custom_call.1} parent=5 // pred_region
        %s313 = ssub.s32 %s15, 2
        // Predicated region
        $region45: #{tpu_custom_call.1} parent=43 // pred_check
          %p314 = pneg %p84
        $region46: #{tpu_custom_call.1} parent=43 // pred_check_branch
          %316 = sbr.rel (%p314) target = $region48
        $region47: #{tpu_custom_call.1} parent=43 // pred_region
          %p317 = scmp.lt.s32.totalorder %s26, 1
          %s318 = scalar_select %p317, %s26, 1
          %s319 = smul.addr %s318, 4
          %s320 = scalar_lea.vmem %s1, %s319
        $region48: #{tpu_custom_call.1} parent=43 // pred_fallthru
          _
        // Predicated region
        $region49: #{tpu_custom_call.1} parent=43 // pred_check
          %p321 = pneg %p110
        $region50: #{tpu_custom_call.1} parent=43 // pred_check_branch
          %323 = sbr.rel (%p321) target = $region52
        $region51: #{tpu_custom_call.1} parent=43 // pred_region
          %s324 = sand.u32 %s95, 1
          %s325 = scalar_lea.sflag [#allocation4], %s324
          %s326 = sand.u32 %s95, 1
          %s327 = smul.addr %s326, 4
          %s328 = scalar_lea.vmem [#allocation5], %s327
          %329 = dma.done %s325, 64
        $region52: #{tpu_custom_call.1} parent=43 // pred_fallthru
          _
      $region44: #{tpu_custom_call.1} parent=5 // pred_fallthru
        _
    $region6: #{tpu_custom_call.1} parent=1 // loop_footer
      %s19 = sadd.s32 1, %s15
    $region7: #{tpu_custom_call.1} parent=1 // loop_footer_branch
      %14 = sbr.rel target = $region3
    $region8: #{tpu_custom_call.1} parent=1 // loop_exit
      _
    %330 = vsyncpa [#allocation3], 1
    %s331 = scalar_lea.sflag [#allocation3], 1
    %332 = vsyncpa %s331, 1
    %333 = vsyncpa [#allocation4], 1
    %s334 = scalar_lea.sflag [#allocation4], 1
    %335 = vsyncpa %s334, 1

</llo_original>
